<compile_context>
chip_gen: v7x
topology: tpu7x:2x2x1
jax: 0.10.0
libtpu: 0.0.40
codegen_flags: <defaults>
</compile_context>

<pallas_src>
import jax
import jax.numpy as jnp
from jax.experimental import pallas as pl
from jax.experimental.pallas import tpu as pltpu


Z_DIM = 100
CHANNELS = [Z_DIM, 512, 256, 128, 64, 3]


def _round_up(x, m):
    return ((x + m - 1) // m) * m


# ----------------------------------------------------------------------------
# Pallas matmul: bf16 operands, f32 accumulation, optional fused tanh epilogue
# ----------------------------------------------------------------------------
def _make_matmul_kernel(activation):
    def kernel(a_ref, b_ref, o_ref):
        acc = jnp.dot(a_ref[...], b_ref[...],
                      preferred_element_type=jnp.float32)
        if activation == "tanh":
            acc = jnp.tanh(acc)          # EUP slot; free next to the MXU work
        o_ref[...] = acc
    return kernel


def pallas_matmul(a, b, *, tm=None, tn=None, activation=None):
    """(M, K) @ (K, N) -> (M, N) float32 on the MXU.

    Operands are cast to bfloat16; accumulation is float32.  Grid order is
    (N-tiles, M-tiles) with M innermost and the weight BlockSpec independent
    of the M index, so each full-K weight panel is DMA'd once per N-tile and
    stays VMEM-resident across the inner M sweep.
    """
    M, K = a.shape
    K2, N = b.shape
    assert K == K2
    Kp = _round_up(K, 128)
    if tm is None:
        tm = _round_up(M, 16)            # single M block (bf16 sublane pack = 16)
    Mp = _round_up(M, tm)
    if tn is None:
        tn = min(_round_up(N, 128), 2048)
    Np = _round_up(N, tn)

    a_bf = a.astype(jnp.bfloat16)
    b_bf = b.astype(jnp.bfloat16)
    if (Mp, Kp) != (M, K):
        a_bf = jnp.pad(a_bf, ((0, Mp - M), (0, Kp - K)))
    if (Kp, Np) != (K, N):
        b_bf = jnp.pad(b_bf, ((0, Kp - K), (0, Np - N)))

    cost = pl.CostEstimate(
        flops=2 * Mp * Kp * Np,
        transcendentals=(Mp * Np if activation == "tanh" else 0),
        bytes_accessed=Mp * Kp * 2 + Kp * Np * 2 + Mp * Np * 4)

    out = pl.pallas_call(
        _make_matmul_kernel(activation),
        out_shape=jax.ShapeDtypeStruct((Mp, Np), jnp.float32),
        grid_spec=pltpu.PrefetchScalarGridSpec(
            num_scalar_prefetch=0,
            grid=(Np // tn, Mp // tm),                        # M innermost
            in_specs=[
                pl.BlockSpec((tm, Kp), lambda j, i: (i, 0)),
                # weight panel: index independent of i -> resident over M sweep
                pl.BlockSpec((Kp, tn), lambda j, i: (0, j)),
            ],
            out_specs=pl.BlockSpec((tm, tn), lambda j, i: (i, j)),
        ),
        compiler_params=pltpu.CompilerParams(
            dimension_semantics=("parallel", "parallel"),
            vmem_limit_bytes=32 * 1024 * 1024),
        cost_estimate=cost,
    )(a_bf, b_bf)
    return out[:M, :N]


# ----------------------------------------------------------------------------
# Fused BatchNorm2d (training-mode batch stats) + ReLU
# ----------------------------------------------------------------------------
def _bn_relu_kernel(x_ref, g_ref, b_ref, o_ref):
    x = x_ref[...]
    mean = jnp.mean(x, axis=0, keepdims=True)
    var = jnp.mean(jnp.square(x - mean), axis=0, keepdims=True)
    y = (x - mean) * jax.lax.rsqrt(var + 1e-5) * g_ref[...] + b_ref[...]
    o_ref[...] = jnp.maximum(y, 0.0)


def batchnorm_relu(x, gamma, beta):
    """x: (N, H, W, C) f32; stats over (N, H, W) per channel, eps=1e-5."""
    n, h, w, c = x.shape
    m = n * h * w
    x2d = x.reshape(m, c)
    out = pl.pallas_call(
        _bn_relu_kernel,
        out_shape=jax.ShapeDtypeStruct((m, c), jnp.float32),
        grid=(1,),
        in_specs=[
            pl.BlockSpec((m, c), lambda i: (0, 0)),
            pl.BlockSpec((1, c), lambda i: (0, 0)),
            pl.BlockSpec((1, c), lambda i: (0, 0)),
        ],
        out_specs=pl.BlockSpec((m, c), lambda i: (0, 0)),
    )(x2d, gamma.reshape(1, c), beta.reshape(1, c))
    return out.reshape(n, h, w, c)


# ----------------------------------------------------------------------------
# ConvTranspose2d layers
# ----------------------------------------------------------------------------
def conv_transpose_1x1_s1(x_nc, w, *, tn):
    """First layer: ConvTranspose2d(z, Cout, 4, stride=1, pad=0) on a 1x1 map.
    This is a plain matmul.  x_nc: (N, Cin).  w: (Cin, Cout, 4, 4)."""
    Cin, Cout, K, _ = w.shape
    w_mat = jnp.transpose(w, (0, 2, 3, 1)).reshape(Cin, K * K * Cout)
    y = pallas_matmul(x_nc, w_mat, tn=tn)                 # (N, K*K*Cout)
    return y.reshape(-1, K, K, Cout)                      # NHWC


def _phase_weight(w):
    """(Cin, Cout, 4, 4) ConvTranspose2d weight -> (4*Cin, 4*Cout) matrix.
    Row order (dh, dw, ci) matches the 2x2 im2col; column order (rh, rw, co)
    are the 4 output phases:  W[(dh,dw,ci),(rh,rw,co)] = w[ci,co,3-rh-2dh,3-rw-2dw]."""
    Cin, Cout = w.shape[0], w.shape[1]
    d_blocks = []
    for dh in range(2):
        for dw in range(2):
            r_blocks = []
            for rh in range(2):
                for rw in range(2):
                    r_blocks.append(w[:, :, 3 - rh - 2 * dh, 3 - rw - 2 * dw])
            d_blocks.append(jnp.stack(r_blocks, axis=1).reshape(Cin, 4 * Cout))
    return jnp.stack(d_blocks, axis=0).reshape(4 * Cin, 4 * Cout)


def conv_transpose_s2(x, w, *, tn, tm=None, activation=None):
    """ConvTranspose2d(Cin, Cout, 4, stride=2, pad=1) via 4-phase decomposition.
    x: (N, H, W, Cin) NHWC.  w: (Cin, Cout, 4, 4).  Returns (N, 2H, 2W, Cout)."""
    N, H, W, Cin = x.shape
    Cout = w.shape[1]
    H1, W1 = H + 1, W + 1

    # 2x2 im2col over the 1-padded (un-dilated!) input; column order (dh, dw, ci).
    xp = jnp.pad(x.astype(jnp.bfloat16), ((0, 0), (1, 1), (1, 1), (0, 0)))
    cols = [xp[:, dh:dh + H1, dw:dw + W1, :]
            for dh in range(2) for dw in range(2)]
    patches = jnp.stack(cols, axis=3).reshape(N * H1 * W1, 4 * Cin)

    w_all = _phase_weight(w)                               # (4*Cin, 4*Cout)
    y = pallas_matmul(patches, w_all, tn=tn, tm=tm, activation=activation)
    y6 = y.reshape(N, H1, W1, 2, 2, Cout)

    # out[n, 2i+rh, 2j+rw, co] = y6[n, i+rh, j+rw, rh, rw, co]
    rows = []
    for rh in range(2):
        cs = []
        for rw in range(2):
            cs.append(y6[:, rh:rh + H, rw:rw + W, rh, rw, :])   # (N, H, W, Cout)
        rows.append(jnp.stack(cs, axis=3))                      # (N, H, W, 2, Cout)
    out = jnp.stack(rows, axis=2)                               # (N, H, 2, W, 2, Cout)
    return out.reshape(N, 2 * H, 2 * W, Cout)


# Plain-JAX reference for ConvTranspose2d (NHWC) used only for self-checking.
def _conv_transpose_ref(x, w, *, stride, pad):
    K = w.shape[2]
    rhs = jnp.transpose(w[:, :, ::-1, ::-1], (2, 3, 0, 1))  # (kh, kw, Cin, Cout)
    return jax.lax.conv_general_dilated(
        x, rhs, window_strides=(1, 1),
        padding=[(K - 1 - pad, K - 1 - pad)] * 2,
        lhs_dilation=(stride, stride),
        dimension_numbers=("NHWC", "HWIO", "NHWC"))


# ----------------------------------------------------------------------------
# Generator
# ----------------------------------------------------------------------------
def init_params(key):
    params = {}
    for i in range(5):
        key, sub = jax.random.split(key)
        params[f"w{i}"] = 0.02 * jax.random.normal(
            sub, (CHANNELS[i], CHANNELS[i + 1], 4, 4), jnp.float32)
        if i < 4:
            params[f"gamma{i}"] = jnp.ones((CHANNELS[i + 1],), jnp.float32)
            params[f"beta{i}"] = jnp.zeros((CHANNELS[i + 1],), jnp.float32)
    return params


@jax.jit
def generator_forward(noise, params):
    """noise: (N, z_dim) f32 -> images (N, 3, 64, 64) in [-1, 1] (NCHW)."""
    nb = noise.shape[0]
    # Layer 0: ConvTranspose2d(z, 512, 4, 1, 0) on 1x1 == plain matmul -> 4x4x512
    x = conv_transpose_1x1_s1(noise.reshape(nb, Z_DIM), params["w0"], tn=2048)
    x = batchnorm_relu(x, params["gamma0"], params["beta0"])
    # Layers 1-3: stride-2 deconv (phase-decomposed) + fused BN + ReLU.
    for li, tn in zip((1, 2, 3), (512, 256, 128)):
        x = conv_transpose_s2(x, params[f"w{li}"], tn=tn)
        x = batchnorm_relu(x, params[f"gamma{li}"], params[f"beta{li}"])
    # Layer 4: stride-2 deconv with Tanh fused into the matmul epilogue.
    x = conv_transpose_s2(x, params["w4"], tn=128, tm=1152, activation="tanh")
    return jnp.transpose(x, (0, 3, 1, 2))                  # back to NCHW


if __name__ == "__main__":
    key = jax.random.PRNGKey(0)
    pkey, nkey, ckey1, ckey2 = jax.random.split(key, 4)

    # --- numerical self-check of the phase-decomposed ConvTranspose2d -------
    xc = jax.random.normal(ckey1, (2, 4, 4, 8), jnp.float32)
    wc = 0.1 * jax.random.normal(ckey2, (8, 16, 4, 4), jnp.float32)
    got = conv_transpose_s2(xc, wc, tn=128)
    ref = _conv_transpose_ref(xc.astype(jnp.bfloat16).astype(jnp.float32),
                              wc.astype(jnp.bfloat16).astype(jnp.float32),
                              stride=2, pad=1)
    got, ref = jax.block_until_ready((got, ref))
    assert got.shape == ref.shape == (2, 8, 8, 16), (got.shape, ref.shape)
    assert jnp.allclose(got, ref, atol=3e-2, rtol=3e-2), \
        float(jnp.max(jnp.abs(got - ref)))

    # --- full generator forward ---------------------------------------------
    params = init_params(pkey)
    noise = jax.random.normal(nkey, (2, Z_DIM), jnp.float32)   # batch=2

    out = generator_forward(noise, params)
    out = jax.block_until_ready(out)

    assert out.shape == (2, 3, 64, 64), out.shape
    assert bool(jnp.all(jnp.isfinite(out)))
    assert float(jnp.max(jnp.abs(out))) <= 1.0 + 1e-5          # Tanh range
    print("KERNEL_OK")
</pallas_src>

<mosaic_0001>
module attributes {stable_mosaic.version = 11 : i64} {
  func.func @kernel(%arg0: i32, %arg1: i32, %arg2: memref<64x128xbf16, #tpu.memory_space<vmem>>, %arg3: memref<128x128xbf16, #tpu.memory_space<vmem>>, %arg4: memref<64x128xf32, #tpu.memory_space<vmem>>) attributes {dimension_semantics = [#tpu.dimension_semantics<parallel>, #tpu.dimension_semantics<parallel>], iteration_bounds = array<i64: 1, 1>, scalar_prefetch = 0 : i64, scratch_operands = 0 : i64, tpu.core_type = #tpu.core_type<tc>, window_params = [{transform_indices = @transform_0, window_bounds = array<i64: 64, 128>}, {transform_indices = @transform_1, window_bounds = array<i64: 128, 128>}, {transform_indices = @transform_2, window_bounds = array<i64: 64, 128>}]} {
    %c0 = arith.constant 0 : index
    %c0_0 = arith.constant 0 : index
    %0 = vector.load %arg2[%c0, %c0_0] : memref<64x128xbf16, #tpu.memory_space<vmem>>, vector<64x128xbf16>
    %c0_1 = arith.constant 0 : index
    %c0_2 = arith.constant 0 : index
    %1 = vector.load %arg3[%c0_1, %c0_2] : memref<128x128xbf16, #tpu.memory_space<vmem>>, vector<128x128xbf16>
    %cst = arith.constant dense<0.000000e+00> : vector<64x128xf32>
    %2 = tpu.matmul %0, %1, %cst {dimension_numbers = #tpu.dot_dimension_numbers<[1], [0], [0], [1], [0, 0, 1, 1], [], []>} : vector<64x128xbf16>, vector<128x128xbf16>, vector<64x128xf32> -> vector<64x128xf32>
    %c0_3 = arith.constant 0 : index
    %c0_4 = arith.constant 0 : index
    %3 = vector.load %arg4[%c0_3, %c0_4] : memref<64x128xf32, #tpu.memory_space<vmem>>, vector<64x128xf32>
    tpu.vector_store %arg4[%c0_3, %c0_4], %2 {strides = array<i32>} : memref<64x128xf32, #tpu.memory_space<vmem>>, vector<64x128xf32>,
    return
  }
  func.func @transform_0(%arg0: i32, %arg1: i32) -> (i32, i32) {
    %c0_i32 = arith.constant 0 : i32
    %c0_i32_0 = arith.constant 0 : i32
    return %arg1, %c0_i32 : i32, i32
  }
  func.func @transform_1(%arg0: i32, %arg1: i32) -> (i32, i32) {
    %c0_i32 = arith.constant 0 : i32
    %c0_i32_0 = arith.constant 0 : i32
    return %c0_i32, %arg0 : i32, i32
  }
  func.func @transform_2(%arg0: i32, %arg1: i32) -> (i32, i32) {
    %c0_i32 = arith.constant 0 : i32
    return %arg1, %arg0 : i32, i32
  }
}

</mosaic_0001>

<llo_original>
// kernel: tpu_custom_call.1
$region0: #{tpu_custom_call.1}
  #allocation0 [shape = 'u32[]', space=smem, size = 0x4, offset = 0x4, fixed_abs, tag = 'smem constant byte address 0x4 - core index']
  #allocation1 [shape = 'u32[144,128]{1,0:T(1,128)}', space=vmem, size = 0x12000, scoped, tag = 'internal scratch']
  %s0 = inlined_call_operand.hbm [shape: bf16[64,128], index: 0, kind: input, shape index: {}]
  %s1 = inlined_call_operand.hbm [shape: bf16[128,128], index: 1, kind: input, shape index: {}]
  %s2 = inlined_call_operand.hbm [shape: f32[64,128], index: 2, kind: output, shape index: {}]
  %s3 = sld [smem:[#allocation0]]
  $region26: #{tpu_custom_call.1} parent=0
    _
  %s5 = ssub.s32 1, %s3
  %s6 = scalar_select 0, %s5, %s3
  $region1: #{tpu_custom_call.1} parent=0
    #allocation2 [shape = 'u8[16384]{0}', space=vmem, size = 0x4000, scoped, tag = 'input window, operand 0, single buffered']
    #allocation3 [shape = 's32[1]{0}', space=sflag, size = 0x4, scoped, tag = 'scoped memory for tpu_custom_call.1']
    #allocation4 [shape = 's32[1]{0}', space=sflag, size = 0x4, scoped, tag = 'scoped memory for tpu_custom_call.1']
    #allocation5 [shape = 'u8[32768]{0}', space=vmem, size = 0x8000, scoped, tag = 'input window, operand 1, single buffered']
    #allocation6 [shape = 's32[1]{0}', space=sflag, size = 0x4, scoped, tag = 'scoped memory for tpu_custom_call.1']
    #allocation7 [shape = 'u8[32768]{0}', space=vmem, size = 0x8000, scoped, tag = 'output window, operand 0, single buffered']
    %7 = vsyncpa [#allocation3], 0
    %8 = vsyncpa [#allocation6], 0
    %9 = vsyncpa [#allocation4], 0
    // Predicated region
    $region2: #{tpu_custom_call.1} parent=1 // pred_check
      _
    $region3: #{tpu_custom_call.1} parent=1 // pred_check_branch
      %11 = sbr.rel (0) target = $region5
    $region4: #{tpu_custom_call.1} parent=1 // pred_region
      %s13 = ssub.s32 512, 512
      %14 = vsyncadd [#allocation3], %s13
      %s15 = sshll.u32 [#allocation2], 4
      %s16 = int_to_ptr.vmem [resolvable:$true] %s15
      %21 = dma.hbm_to_vmem [thread:$0]  %s0, 512, %s16, [#allocation3], 64, 64, 4
    $region5: #{tpu_custom_call.1} parent=1 // pred_fallthru
      _
    // Predicated region
    $region6: #{tpu_custom_call.1} parent=1 // pred_check
      _
    $region7: #{tpu_custom_call.1} parent=1 // pred_check_branch
      %23 = sbr.rel (0) target = $region9
    $region8: #{tpu_custom_call.1} parent=1 // pred_region
      %s25 = ssub.s32 1024, 1024
      %26 = vsyncadd [#allocation6], %s25
      %s27 = sshll.u32 [#allocation5], 4
      %s28 = int_to_ptr.vmem [resolvable:$true] %s27
      %33 = dma.hbm_to_vmem [thread:$0]  %s1, 1024, %s28, [#allocation6], 64, 64, 4
    $region9: #{tpu_custom_call.1} parent=1 // pred_fallthru
      _
    // Predicated region
    $region10: #{tpu_custom_call.1} parent=1 // pred_check
      _
    $region11: #{tpu_custom_call.1} parent=1 // pred_check_branch
      %35 = sbr.rel (0) target = $region13
    $region12: #{tpu_custom_call.1} parent=1 // pred_region
      %36 = dma.done [#allocation3], 512
    $region13: #{tpu_custom_call.1} parent=1 // pred_fallthru
      _
    // Predicated region
    $region14: #{tpu_custom_call.1} parent=1 // pred_check
      _
    $region15: #{tpu_custom_call.1} parent=1 // pred_check_branch
      %38 = sbr.rel (0) target = $region17
    $region16: #{tpu_custom_call.1} parent=1 // pred_region
      %39 = dma.done [#allocation6], 1024
    $region17: #{tpu_custom_call.1} parent=1 // pred_fallthru
      _
    %v41 = vld [vmem:[#allocation2] sm:$0xf]
    %v42 = vld [vmem:[#allocation2 + $0x4] sm:$0xf]
    %v43 = vld [vmem:[#allocation2 + $0x8] sm:$0xf]
    %v44 = vld [vmem:[#allocation2 + $0xc] sm:$0xf]
    %v45 = vld [vmem:[#allocation2 + $0x10] sm:$0xf]
    %v46 = vld [vmem:[#allocation2 + $0x14] sm:$0xf]
    %v47 = vld [vmem:[#allocation2 + $0x18] sm:$0xf]
    %v48 = vld [vmem:[#allocation2 + $0x1c] sm:$0xf]
    %v49 = vld [vmem:[#allocation5] sm:$0xf]
    %v50 = vld [vmem:[#allocation5 + $0x4] sm:$0xf]
    %v51 = vld [vmem:[#allocation5 + $0x8] sm:$0xf]
    %v52 = vld [vmem:[#allocation5 + $0xc] sm:$0xf]
    %v53 = vld [vmem:[#allocation5 + $0x10] sm:$0xf]
    %v54 = vld [vmem:[#allocation5 + $0x14] sm:$0xf]
    %v55 = vld [vmem:[#allocation5 + $0x18] sm:$0xf]
    %v56 = vld [vmem:[#allocation5 + $0x1c] sm:$0xf]
    %v57 = vld [vmem:[#allocation5 + $0x20] sm:$0xf]
    %v58 = vld [vmem:[#allocation5 + $0x24] sm:$0xf]
    %v59 = vld [vmem:[#allocation5 + $0x28] sm:$0xf]
    %v60 = vld [vmem:[#allocation5 + $0x2c] sm:$0xf]
    %v61 = vld [vmem:[#allocation5 + $0x30] sm:$0xf]
    %v62 = vld [vmem:[#allocation5 + $0x34] sm:$0xf]
    %v63 = vld [vmem:[#allocation5 + $0x38] sm:$0xf]
    %v64 = vld [vmem:[#allocation5 + $0x3c] sm:$0xf]
    %v73 = vunpack.c.l.b16 %v41
    %v74 = vunpack.c.l.b16 %v42
    %v75 = vunpack.c.l.b16 %v43
    %v76 = vunpack.c.l.b16 %v44
    %v77 = vunpack.c.l.b16 %v45
    %v78 = vunpack.c.l.b16 %v46
    %v79 = vunpack.c.l.b16 %v47
    %v80 = vunpack.c.l.b16 %v48
    %v81 = vpack.c.b16 %v74, %v73
    %v82 = vpack.c.b16 %v76, %v75
    %v83 = vpack.c.b16 %v78, %v77
    %v84 = vpack.c.b16 %v80, %v79
    %v105 = vunpack.c.l.b16 %v49
    %v106 = vunpack.c.l.b16 %v50
    %v107 = vunpack.c.l.b16 %v51
    %v108 = vunpack.c.l.b16 %v52
    %v109 = vunpack.c.l.b16 %v53
    %v110 = vunpack.c.l.b16 %v54
    %v111 = vunpack.c.l.b16 %v55
    %v112 = vunpack.c.l.b16 %v56
    %v113 = vunpack.c.l.b16 %v57
    %v114 = vunpack.c.l.b16 %v58
    %v115 = vunpack.c.l.b16 %v59
    %v116 = vunpack.c.l.b16 %v60
    %v117 = vunpack.c.l.b16 %v61
    %v118 = vunpack.c.l.b16 %v62
    %v119 = vunpack.c.l.b16 %v63
    %v120 = vunpack.c.l.b16 %v64
    %v121 = vpack.c.b16 %v106, %v105
    %v122 = vpack.c.b16 %v108, %v107
    %v123 = vpack.c.b16 %v110, %v109
    %v124 = vpack.c.b16 %v112, %v111
    %v125 = vpack.c.b16 %v114, %v113
    %v126 = vpack.c.b16 %v116, %v115
    %v127 = vpack.c.b16 %v118, %v117
    %v128 = vpack.c.b16 %v120, %v119
    %137 = vmatprep.subr.bf16.mxu0 0
    %138 = vmatpush1.bf16.msra.mxu0 %v121
    %139 = vmatprep.subr.bf16.mxu0 0
    %140 = vmatpush1.bf16.msra.mxu0 %v122
    %141 = vmatprep.subr.bf16.mxu0 0
    %142 = vmatpush1.bf16.msra.mxu0 %v123
    %143 = vmatprep.subr.bf16.mxu0 0
    %144 = vmatpush1.bf16.msra.mxu0 %v124
    %145 = vmatprep.subr.bf16.mxu0 0
    %146 = vmatpush1.bf16.msra.mxu0 %v125
    %147 = vmatprep.subr.bf16.mxu0 0
    %148 = vmatpush1.bf16.msra.mxu0 %v126
    %149 = vmatprep.subr.bf16.mxu0 0
    %150 = vmatpush1.bf16.msra.mxu0 %v127
    %151 = vmatprep.subr.bf16.mxu0 0
    %152 = vmatpush1.bf16.msra.mxu0 %v128
    %153 = vmatprep.subr.bf16.mxu0 0
    %154 = vmatpush1.bf16.msra.mxu0 0
    %155 = vmatprep.subr.bf16.mxu0 0
    %156 = vmatpush1.bf16.msra.mxu0 0
    %157 = vmatprep.subr.bf16.mxu0 0
    %158 = vmatpush1.bf16.msra.mxu0 0
    %159 = vmatprep.subr.bf16.mxu0 0
    %160 = vmatpush1.bf16.msra.mxu0 0
    %161 = vmatprep.subr.bf16.mxu0 0
    %162 = vmatpush1.bf16.msra.mxu0 0
    %163 = vmatprep.subr.bf16.mxu0 0
    %164 = vmatpush1.bf16.msra.mxu0 0
    %165 = vmatprep.subr.bf16.mxu0 0
    %166 = vmatpush1.bf16.msra.mxu0 0
    %167 = vmatprep.subr.bf16.mxu0 0
    %168 = vmatpush1.bf16.msra.mxu0 0
    %169 = vmatprep.mubr.bf16.mxu0 0
    %170 = vmatmul.mubr.bf16.gmra.mrb[0].mxu0 %v81
    %v171 = vpop.f32.mrb[0].mxu0
    %v172 = vadd.f32 0.0, %v171
    %v173 = vpop.f32.mrb[0].mxu0
    %v174 = vpop.f32.mrb[0].mxu0
    %v175 = vadd.f32 0.0, %v174
    %v176 = vpop.f32.mrb[0].mxu0
    %177 = vmatprep.mubr.bf16.mxu0 0
    %178 = vmatmul.mubr.bf16.gmra.mrb[0].mxu0 %v82
    %v179 = vpop.f32.mrb[0].mxu0
    %v180 = vadd.f32 0.0, %v179
    %v181 = vpop.f32.mrb[0].mxu0
    %v182 = vpop.f32.mrb[0].mxu0
    %v183 = vadd.f32 0.0, %v182
    %v184 = vpop.f32.mrb[0].mxu0
    %185 = vmatprep.mubr.bf16.mxu0 0
    %186 = vmatmul.mubr.bf16.gmra.mrb[0].mxu0 %v83
    %v187 = vpop.f32.mrb[0].mxu0
    %v188 = vadd.f32 0.0, %v187
    %v189 = vpop.f32.mrb[0].mxu0
    %v190 = vpop.f32.mrb[0].mxu0
    %v191 = vadd.f32 0.0, %v190
    %v192 = vpop.f32.mrb[0].mxu0
    %193 = vmatprep.mubr.bf16.mxu0 0
    %194 = vmatmul.mubr.bf16.gmra.mrb[0].mxu0 %v84
    %v195 = vpop.f32.mrb[0].mxu0
    %v196 = vadd.f32 0.0, %v195
    %v197 = vpop.f32.mrb[0].mxu0
    %v198 = vpop.f32.mrb[0].mxu0
    %v199 = vadd.f32 0.0, %v198
    %v200 = vpop.f32.mrb[0].mxu0
    %201 = vdwg.mxu0
    %202 = vst [vmem:[#allocation7] sm:$0xff] %v172
    %203 = vst [vmem:[#allocation7 + $0x8] sm:$0xff] %v175
    %204 = vst [vmem:[#allocation7 + $0x10] sm:$0xff] %v180
    %205 = vst [vmem:[#allocation7 + $0x18] sm:$0xff] %v183
    %206 = vst [vmem:[#allocation7 + $0x20] sm:$0xff] %v188
    %207 = vst [vmem:[#allocation7 + $0x28] sm:$0xff] %v191
    %208 = vst [vmem:[#allocation7 + $0x30] sm:$0xff] %v196
    %209 = vst [vmem:[#allocation7 + $0x38] sm:$0xff] %v199
    // Predicated region
    $region18: #{tpu_custom_call.1} parent=1 // pred_check
      _
    $region19: #{tpu_custom_call.1} parent=1 // pred_check_branch
      %211 = sbr.rel (0) target = $region21
    $region20: #{tpu_custom_call.1} parent=1 // pred_region
      %s213 = ssub.s32 1024, 1024
      %214 = vsyncadd [#allocation4], %s213
      %s215 = sshll.u32 [#allocation7], 4
      %s216 = int_to_ptr.vmem [resolvable:$true] %s215
      %221 = dma.vmem_to_hbm [thread:$0]  %s216, 1024, %s2, [#allocation4], 128, 128, 8
    $region21: #{tpu_custom_call.1} parent=1 // pred_fallthru
      _
    // Predicated region
    $region22: #{tpu_custom_call.1} parent=1 // pred_check
      _
    $region23: #{tpu_custom_call.1} parent=1 // pred_check_branch
      %223 = sbr.rel (0) target = $region25
    $region24: #{tpu_custom_call.1} parent=1 // pred_region
      %224 = dma.done [#allocation4], 1024
    $region25: #{tpu_custom_call.1} parent=1 // pred_fallthru
      _
    %225 = vsyncpa [#allocation3], 1
    %226 = vsyncpa [#allocation6], 1
    %227 = vsyncpa [#allocation4], 1

</llo_original>
